<compile_context>
chip_gen: v5e
topology: v5e:2x2
jax: 0.10.0
libtpu: 0.0.40
codegen_flags: <defaults>
</compile_context>

<pallas_src>
import jax
import jax.numpy as jnp
from jax import lax
from jax.experimental import pallas as pl
from jax.experimental.pallas import tpu as pltpu


def _round_up(x, m):
    return ((x + m - 1) // m) * m


def _make_kernel(n_valid, tm, tn):
    """n_valid = 2B actual rows; tm/tn = row/col tile sizes (static)."""

    def kernel(tau_ref, zr_ref, zc_ref, zp_ref, out_ref, m_sc, s_sc):
        i = pl.program_id(0)
        j = pl.program_id(1)
        n_col_blocks = pl.num_programs(1)

        @pl.when(j == 0)
        def _():
            m_sc[...] = jnp.full_like(m_sc, -jnp.inf)
            s_sc[...] = jnp.zeros_like(s_sc)

        inv_tau = 1.0 / tau_ref[0, 0]
        # Fold 1/tau into the small (tm, D) operand instead of the (tm, tn) sim tile.
        zr = zr_ref[...] * inv_tau

        # Similarity tile on the MXU; contraction over the last dim of both operands
        # (no explicit transpose is materialized).
        sim = lax.dot_general(
            zr,
            zc_ref[...],
            dimension_numbers=(((1,), (1,)), ((), ())),
            preferred_element_type=jnp.float32,
        )  # (tm, tn)

        # Exclude the diagonal (self-similarity) and zero-padded columns.
        row = i * tm + lax.broadcasted_iota(jnp.int32, (tm, tn), 0)
        col = j * tn + lax.broadcasted_iota(jnp.int32, (tm, tn), 1)
        sim = jnp.where((row == col) | (col >= n_valid), -jnp.inf, sim)

        # Online (flash-style) log-sum-exp update.
        m_prev = m_sc[...]
        m_new = jnp.maximum(m_prev, jnp.max(sim, axis=-1, keepdims=True))
        alpha = jnp.exp(m_prev - m_new)          # exp(-inf) == 0 at j == 0
        p = jnp.exp(sim - m_new)
        s_sc[...] = alpha * s_sc[...] + jnp.sum(p, axis=-1, keepdims=True)
        m_sc[...] = m_new

        @pl.when(j == n_col_blocks - 1)
        def _():
            # Positive pair: row r pairs with row (r + B) mod 2B.  The partner operand
            # is pre-arranged wrapper-side (concat-order swap == roll by B), so this is
            # a rowwise O(tm * D) dot.  zr is already scaled by 1/tau.
            pos = jnp.sum(zr * zp_ref[...], axis=-1, keepdims=True)  # (tm, 1)
            lse = m_sc[...] + jnp.log(s_sc[...])
            row_id = i * tm + lax.broadcasted_iota(jnp.int32, (tm, 1), 0)
            valid = row_id < n_valid
            out_ref[...] = jnp.where(valid, lse - pos, 0.0)

    return kernel


def contrastive_loss_2(z_1, z_2, tau, *, block_size=256):
    """Pallas equivalent of ContrastiveLoss_2(tau)(z_1, z_2) for (B, D) inputs."""
    assert z_1.shape == z_2.shape and z_1.ndim == 2
    B, D = z_1.shape
    n = 2 * B

    # Glue: z = [z1; z2]; partner view [z2; z1] == roll(z, B, axis=0) for free.
    z = jnp.concatenate([z_1, z_2], axis=0).astype(jnp.float32)          # (2B, D)
    z_partner = jnp.concatenate([z_2, z_1], axis=0).astype(jnp.float32)  # (2B, D)

    # Tile sizes: last two block dims must be multiples of (8, 128) (or full size).
    t = block_size if n > block_size else _round_up(n, 8)
    n_pad = _round_up(n, t)
    d_pad = _round_up(D, 128)
    if n_pad != n or d_pad != D:
        z = jnp.pad(z, ((0, n_pad - n), (0, d_pad - D)))
        z_partner = jnp.pad(z_partner, ((0, n_pad - n), (0, d_pad - D)))

    tau_arr = jnp.full((1, 1), tau, dtype=jnp.float32)
    n_blocks = n_pad // t

    per_row = pl.pallas_call(
        _make_kernel(n, t, t),
        out_shape=jax.ShapeDtypeStruct((n_pad, 1), jnp.float32),
        grid_spec=pltpu.PrefetchScalarGridSpec(
            num_scalar_prefetch=0,
            grid=(n_blocks, n_blocks),
            in_specs=[
                pl.BlockSpec((1, 1), lambda i, j: (0, 0), memory_space=pltpu.SMEM),
                pl.BlockSpec((t, d_pad), lambda i, j: (i, 0)),  # row block of z
                pl.BlockSpec((t, d_pad), lambda i, j: (j, 0)),  # col block of z
                pl.BlockSpec((t, d_pad), lambda i, j: (i, 0)),  # partner rows
            ],
            out_specs=pl.BlockSpec((t, 1), lambda i, j: (i, 0)),
            scratch_shapes=[
                pltpu.VMEM((t, 1), jnp.float32),  # running max
                pltpu.VMEM((t, 1), jnp.float32),  # running sum of exp
            ],
        ),
        compiler_params=pltpu.CompilerParams(
            dimension_semantics=("parallel", "arbitrary"),
        ),
    )(tau_arr, z, z, z_partner)

    # Padded rows were written as 0, so a plain sum / n gives the mean over 2B rows.
    return jnp.sum(per_row) / jnp.float32(n)


def _reference_loss(z_1, z_2, tau):
    """Pure-JAX reference mirroring the PyTorch forward (for verification)."""
    z1 = z_1[:, None, :]
    z2 = z_2[:, None, :]
    B = z1.shape[0]
    z = jnp.concatenate([z1, z2], axis=0)             # (2B, 1, D)
    z = jnp.transpose(z, (1, 0, 2))                   # (1, 2B, D)
    sim = jnp.matmul(z, jnp.transpose(z, (0, 2, 1)))  # (1, 2B, 2B)
    logits = jnp.tril(sim, k=-1)[:, :, :-1] + jnp.triu(sim, k=1)[:, :, 1:]
    logits = logits / tau
    logits = -jax.nn.log_softmax(logits, axis=-1)
    i = jnp.arange(B)
    return (logits[:, i, B + i - 1].mean() + logits[:, B + i, i].mean()) / 2.0


if __name__ == "__main__":
    key = jax.random.PRNGKey(0)

    # Small case consistent with the module's forward (B=4, D=32).
    B, D, tau = 4, 32, 0.5
    k1, k2 = jax.random.split(key)
    z_1 = jax.random.normal(k1, (B, D), dtype=jnp.float32)
    z_2 = jax.random.normal(k2, (B, D), dtype=jnp.float32)
    loss = jax.block_until_ready(contrastive_loss_2(z_1, z_2, tau))
    ref = jax.block_until_ready(_reference_loss(z_1, z_2, tau))
    assert jnp.allclose(loss, ref, atol=1e-5, rtol=1e-5), (loss, ref)

    # Larger, non-aligned case to exercise the tiled/padded path (grid = (2, 2)).
    B2, D2, tau2 = 160, 48, 0.5
    k3, k4 = jax.random.split(k2)
    z_1b = jax.random.normal(k3, (B2, D2), dtype=jnp.float32)
    z_2b = jax.random.normal(k4, (B2, D2), dtype=jnp.float32)
    loss2 = jax.block_until_ready(contrastive_loss_2(z_1b, z_2b, tau2))
    ref2 = jax.block_until_ready(_reference_loss(z_1b, z_2b, tau2))
    assert jnp.allclose(loss2, ref2, atol=1e-4, rtol=1e-4), (loss2, ref2)

    print("KERNEL_OK")
</pallas_src>

<mosaic_0001>
module attributes {stable_mosaic.version = 11 : i64} {
  func.func @kernel(%arg0: i32, %arg1: i32, %arg2: memref<1x1xf32, #tpu.memory_space<smem>>, %arg3: memref<8x128xf32, #tpu.memory_space<vmem>>, %arg4: memref<8x128xf32, #tpu.memory_space<vmem>>, %arg5: memref<8x128xf32, #tpu.memory_space<vmem>>, %arg6: memref<8x1xf32, #tpu.memory_space<vmem>>, %arg7: memref<8x1xf32, #tpu.memory_space<vmem>>, %arg8: memref<8x1xf32, #tpu.memory_space<vmem>>) attributes {dimension_semantics = [#tpu.dimension_semantics<parallel>, #tpu.dimension_semantics<arbitrary>], iteration_bounds = array<i64: 1, 1>, scalar_prefetch = 0 : i64, scratch_operands = 2 : i64, tpu.core_type = #tpu.core_type<tc>, window_params = [{transform_indices = @transform_0, window_bounds = array<i64: 1, 1>}, {transform_indices = @transform_1, window_bounds = array<i64: 8, 128>}, {transform_indices = @transform_2, window_bounds = array<i64: 8, 128>}, {transform_indices = @transform_3, window_bounds = array<i64: 8, 128>}, {transform_indices = @transform_4, window_bounds = array<i64: 8, 1>}]} {
    %c0_i32 = arith.constant 0 : i32
    %0 = arith.cmpi eq, %arg1, %c0_i32 : i32
    %1 = arith.extui %0 : i1 to i32
    %c0_i32_0 = arith.constant 0 : i32
    %2 = arith.cmpi ne, %1, %c0_i32_0 : i32
    scf.if %2 {
      %cst_22 = arith.constant 0xFF800000 : f32
      %43 = vector.broadcast %cst_22 : f32 to vector<8x1xf32>
      %c0_23 = arith.constant 0 : index
      %c0_24 = arith.constant 0 : index
      %44 = vector.load %arg7[%c0_23, %c0_24] : memref<8x1xf32, #tpu.memory_space<vmem>>, vector<8x1xf32>
      tpu.vector_store %arg7[%c0_23, %c0_24], %43 {strides = array<i32>} : memref<8x1xf32, #tpu.memory_space<vmem>>, vector<8x1xf32>,
      %cst_25 = arith.constant 0.000000e+00 : f32
      %45 = vector.broadcast %cst_25 : f32 to vector<8x1xf32>
      %c0_26 = arith.constant 0 : index
      %c0_27 = arith.constant 0 : index
      %46 = vector.load %arg8[%c0_26, %c0_27] : memref<8x1xf32, #tpu.memory_space<vmem>>, vector<8x1xf32>
      tpu.vector_store %arg8[%c0_26, %c0_27], %45 {strides = array<i32>} : memref<8x1xf32, #tpu.memory_space<vmem>>, vector<8x1xf32>,
    } else {
    }
    %c0 = arith.constant 0 : index
    %c0_1 = arith.constant 0 : index
    %3 = memref.load %arg2[%c0, %c0_1] : memref<1x1xf32, #tpu.memory_space<smem>>
    %cst = arith.constant 1.000000e+00 : f32
    %4 = arith.divf %cst, %3 : f32
    %c0_2 = arith.constant 0 : index
    %c0_3 = arith.constant 0 : index
    %5 = vector.load %arg3[%c0_2, %c0_3] : memref<8x128xf32, #tpu.memory_space<vmem>>, vector<8x128xf32>
    %6 = vector.broadcast %4 : f32 to vector<8x128xf32>
    %7 = arith.mulf %5, %6 : vector<8x128xf32>
    %c0_4 = arith.constant 0 : index
    %c0_5 = arith.constant 0 : index
    %8 = vector.load %arg4[%c0_4, %c0_5] : memref<8x128xf32, #tpu.memory_space<vmem>>, vector<8x128xf32>
    %cst_6 = arith.constant dense<0.000000e+00> : vector<8x8xf32>
    %9 = tpu.matmul %7, %8, %cst_6 {dimension_numbers = #tpu.dot_dimension_numbers<[1], [1], [0], [0], [0, 0, 1, 0], [], []>} : vector<8x128xf32>, vector<8x128xf32>, vector<8x8xf32> -> vector<8x8xf32>
    %c8_i32 = arith.constant 8 : i32
    %10 = arith.muli %arg0, %c8_i32 : i32
    %11 = tpu.iota {dimensions = array<i32: 0>} : vector<8x8xi32>
    %12 = vector.broadcast %10 : i32 to vector<8x8xi32>
    %13 = arith.addi %12, %11 : vector<8x8xi32>
    %c8_i32_7 = arith.constant 8 : i32
    %14 = arith.muli %arg1, %c8_i32_7 : i32
    %15 = tpu.iota {dimensions = array<i32: 1>} : vector<8x8xi32>
    %16 = vector.broadcast %14 : i32 to vector<8x8xi32>
    %17 = arith.addi %16, %15 : vector<8x8xi32>
    %18 = arith.cmpi eq, %13, %17 : vector<8x8xi32>
    %c8_i32_8 = arith.constant 8 : i32
    %19 = vector.broadcast %c8_i32_8 : i32 to vector<8x8xi32>
    %20 = arith.cmpi sge, %17, %19 : vector<8x8xi32>
    %21 = arith.ori %18, %20 : vector<8x8xi1>
    %cst_9 = arith.constant 0xFF800000 : f32
    %22 = vector.broadcast %cst_9 : f32 to vector<8x8xf32>
    %23 = arith.select %21, %22, %9 : vector<8x8xi1>, vector<8x8xf32>
    %c0_10 = arith.constant 0 : index
    %c0_11 = arith.constant 0 : index
    %24 = vector.load %arg7[%c0_10, %c0_11] : memref<8x1xf32, #tpu.memory_space<vmem>>, vector<8x1xf32>
    %cst_12 = arith.constant dense<0xFF800000> : vector<8xf32>
    %25 = vector.multi_reduction <maximumf>, %23, %cst_12 [1] : vector<8x8xf32> to vector<8xf32>
    %26 = vector.shape_cast %25 : vector<8xf32> to vector<8x1xf32>
    %27 = arith.maximumf %24, %26 : vector<8x1xf32>
    %28 = arith.subf %24, %27 : vector<8x1xf32>
    %29 = math.exp %28 : vector<8x1xf32>
    %30 = vector.broadcast %27 : vector<8x1xf32> to vector<8x8xf32>
    %31 = arith.subf %23, %30 : vector<8x8xf32>
    %32 = math.exp %31 : vector<8x8xf32>
    %c0_13 = arith.constant 0 : index
    %c0_14 = arith.constant 0 : index
    %33 = vector.load %arg8[%c0_13, %c0_14] : memref<8x1xf32, #tpu.memory_space<vmem>>, vector<8x1xf32>
    %34 = arith.mulf %29, %33 : vector<8x1xf32>
    %cst_15 = arith.constant dense<0.000000e+00> : vector<8xf32>
    %35 = vector.multi_reduction <add>, %32, %cst_15 [1] : vector<8x8xf32> to vector<8xf32>
    %36 = vector.shape_cast %35 : vector<8xf32> to vector<8x1xf32>
    %37 = arith.addf %34, %36 : vector<8x1xf32>
    %c0_16 = arith.constant 0 : index
    %c0_17 = arith.constant 0 : index
    %38 = vector.load %arg8[%c0_16, %c0_17] : memref<8x1xf32, #tpu.memory_space<vmem>>, vector<8x1xf32>
    tpu.vector_store %arg8[%c0_16, %c0_17], %37 {strides = array<i32>} : memref<8x1xf32, #tpu.memory_space<vmem>>, vector<8x1xf32>,
    %c0_18 = arith.constant 0 : index
    %c0_19 = arith.constant 0 : index
    %39 = vector.load %arg7[%c0_18, %c0_19] : memref<8x1xf32, #tpu.memory_space<vmem>>, vector<8x1xf32>
    tpu.vector_store %arg7[%c0_18, %c0_19], %27 {strides = array<i32>} : memref<8x1xf32, #tpu.memory_space<vmem>>, vector<8x1xf32>,
    %c0_i32_20 = arith.constant 0 : i32
    %40 = arith.cmpi eq, %arg1, %c0_i32_20 : i32
    %41 = arith.extui %40 : i1 to i32
    %c0_i32_21 = arith.constant 0 : i32
    %42 = arith.cmpi ne, %41, %c0_i32_21 : i32
    scf.if %42 {
      %c0_22 = arith.constant 0 : index
      %c0_23 = arith.constant 0 : index
      %43 = vector.load %arg5[%c0_22, %c0_23] : memref<8x128xf32, #tpu.memory_space<vmem>>, vector<8x128xf32>
      %44 = arith.mulf %7, %43 : vector<8x128xf32>
      %cst_24 = arith.constant dense<0.000000e+00> : vector<8xf32>
      %45 = vector.multi_reduction <add>, %44, %cst_24 [1] : vector<8x128xf32> to vector<8xf32>
      %46 = vector.shape_cast %45 : vector<8xf32> to vector<8x1xf32>
      %c0_25 = arith.constant 0 : index
      %c0_26 = arith.constant 0 : index
      %47 = vector.load %arg7[%c0_25, %c0_26] : memref<8x1xf32, #tpu.memory_space<vmem>>, vector<8x1xf32>
      %c0_27 = arith.constant 0 : index
      %c0_28 = arith.constant 0 : index
      %48 = vector.load %arg8[%c0_27, %c0_28] : memref<8x1xf32, #tpu.memory_space<vmem>>, vector<8x1xf32>
      %49 = math.log %48 : vector<8x1xf32>
      %50 = arith.addf %47, %49 : vector<8x1xf32>
      %c8_i32_29 = arith.constant 8 : i32
      %51 = arith.muli %arg0, %c8_i32_29 : i32
      %52 = tpu.iota {dimensions = array<i32: 0>} : vector<8x1xi32>
      %53 = vector.broadcast %51 : i32 to vector<8x1xi32>
      %54 = arith.addi %53, %52 : vector<8x1xi32>
      %c8_i32_30 = arith.constant 8 : i32
      %55 = vector.broadcast %c8_i32_30 : i32 to vector<8x1xi32>
      %56 = arith.cmpi slt, %54, %55 : vector<8x1xi32>
      %57 = arith.subf %50, %46 : vector<8x1xf32>
      %cst_31 = arith.constant 0.000000e+00 : f32
      %58 = vector.broadcast %cst_31 : f32 to vector<8x1xf32>
      %59 = arith.select %56, %57, %58 : vector<8x1xi1>, vector<8x1xf32>
      %c0_32 = arith.constant 0 : index
      %c0_33 = arith.constant 0 : index
      %60 = vector.load %arg6[%c0_32, %c0_33] : memref<8x1xf32, #tpu.memory_space<vmem>>, vector<8x1xf32>
      tpu.vector_store %arg6[%c0_32, %c0_33], %59 {strides = array<i32>} : memref<8x1xf32, #tpu.memory_space<vmem>>, vector<8x1xf32>,
    } else {
    }
    return
  }
  func.func @transform_0(%arg0: i32, %arg1: i32) -> (i32, i32) {
    %c0_i32 = arith.constant 0 : i32
    %c0_i32_0 = arith.constant 0 : i32
    %c0_i32_1 = arith.constant 0 : i32
    return %c0_i32, %c0_i32_0 : i32, i32
  }
  func.func @transform_1(%arg0: i32, %arg1: i32) -> (i32, i32) {
    %c0_i32 = arith.constant 0 : i32
    %c0_i32_0 = arith.constant 0 : i32
    return %arg0, %c0_i32 : i32, i32
  }
  func.func @transform_2(%arg0: i32, %arg1: i32) -> (i32, i32) {
    %c0_i32 = arith.constant 0 : i32
    %c0_i32_0 = arith.constant 0 : i32
    return %arg1, %c0_i32 : i32, i32
  }
  func.func @transform_3(%arg0: i32, %arg1: i32) -> (i32, i32) {
    %c0_i32 = arith.constant 0 : i32
    %c0_i32_0 = arith.constant 0 : i32
    return %arg0, %c0_i32 : i32, i32
  }
  func.func @transform_4(%arg0: i32, %arg1: i32) -> (i32, i32) {
    %c0_i32 = arith.constant 0 : i32
    %c0_i32_0 = arith.constant 0 : i32
    return %arg0, %c0_i32 : i32, i32
  }
}

</mosaic_0001>

<llo_original>
// kernel: tpu_custom_call.1
$region0: #{tpu_custom_call.1}
  #allocation0 [shape = 'u32[]', space=smem, size = 0x4, offset = 0x4, fixed_abs, tag = 'smem constant byte address 0x4 - core index']
  #allocation1 [shape = 'u32[72,128]{1,0:T(1,128)}', space=vmem, size = 0x9000, scoped, tag = 'internal scratch']
  #allocation2 [shape = 'f32[8,1]{1,0:T(8,128)}', space=vmem, size = 0x1000, scoped, tag = 'scratch operand']
  #allocation3 [shape = 'f32[8,1]{1,0:T(8,128)}', space=vmem, size = 0x1000, scoped, tag = 'scratch operand']
  #allocation4 [shape = 'f32[1,1]{1,0:T(1,128)S(6)}', space=smem, size = 0x200, scoped, tag = 'scoped memory for tpu_custom_call.1']
  %s0 = inlined_call_operand.<no memory space> [shape: f32[1,1], index: 0, kind: input, shape index: {}]
  %s1 = inlined_call_operand.hbm [shape: f32[8,128], index: 1, kind: input, shape index: {}]
  %s2 = inlined_call_operand.hbm [shape: f32[8,128], index: 2, kind: input, shape index: {}]
  %s3 = inlined_call_operand.hbm [shape: f32[8,128], index: 3, kind: input, shape index: {}]
  %s4 = inlined_call_operand.vmem [shape: f32[8,1], index: 4, kind: output, shape index: {}]
  %s5 = sld [smem:[#allocation0]]
  $region46: #{tpu_custom_call.1} parent=0
    _
  %s7 = ssub.s32 1, %s5
  %s8 = scalar_select 0, %s7, %s5
  %9 = sst [smem:[#allocation4]] %s0
  $region1: #{tpu_custom_call.1} parent=0
    #allocation5 [shape = 'u8[4096]{0}', space=vmem, size = 0x1000, scoped, tag = 'input window, operand 1, single buffered']
    #allocation6 [shape = 's32[1]{0}', space=sflag, size = 0x4, scoped, tag = 'scoped memory for tpu_custom_call.1']
    #allocation7 [shape = 'u8[4096]{0}', space=vmem, size = 0x1000, scoped, tag = 'input window, operand 2, single buffered']
    #allocation8 [shape = 's32[1]{0}', space=sflag, size = 0x4, scoped, tag = 'scoped memory for tpu_custom_call.1']
    #allocation9 [shape = 'u8[4096]{0}', space=vmem, size = 0x1000, scoped, tag = 'input window, operand 3, single buffered']
    %10 = vsyncpa [#allocation6], 0
    %11 = vsyncpa [#allocation8], 0
    // Predicated region
    $region2: #{tpu_custom_call.1} parent=1 // pred_check
      _
    $region3: #{tpu_custom_call.1} parent=1 // pred_check_branch
      %13 = sbr.rel (0) target = $region5
    $region4: #{tpu_custom_call.1} parent=1 // pred_region
      _
    $region5: #{tpu_custom_call.1} parent=1 // pred_fallthru
      _
    // Predicated region
    $region6: #{tpu_custom_call.1} parent=1 // pred_check
      _
    $region7: #{tpu_custom_call.1} parent=1 // pred_check_branch
      %15 = sbr.rel (0) target = $region9
    $region8: #{tpu_custom_call.1} parent=1 // pred_region
      %17 = vsyncadd [#allocation6], 0
      %s19 = sshll.u32 %s1, 4
      %s20 = int_to_ptr.hbm [resolvable:$true] %s19
      %s21 = sshll.u32 [#allocation5], 4
      %s22 = int_to_ptr.vmem [resolvable:$true] %s21
      %24 = dma.hbm_to_vmem [thread:$0]  %s20, 128, %s22, [#allocation6]
    $region9: #{tpu_custom_call.1} parent=1 // pred_fallthru
      _
    // Predicated region
    $region10: #{tpu_custom_call.1} parent=1 // pred_check
      _
    $region11: #{tpu_custom_call.1} parent=1 // pred_check_branch
      %26 = sbr.rel (0) target = $region13
    $region12: #{tpu_custom_call.1} parent=1 // pred_region
      %28 = vsyncadd [#allocation8], 0
      %s30 = sshll.u32 %s2, 4
      %s31 = int_to_ptr.hbm [resolvable:$true] %s30
      %s32 = sshll.u32 [#allocation7], 4
      %s33 = int_to_ptr.vmem [resolvable:$true] %s32
      %35 = dma.hbm_to_vmem [thread:$0]  %s31, 128, %s33, [#allocation8]
    $region13: #{tpu_custom_call.1} parent=1 // pred_fallthru
      _
    // Predicated region
    $region14: #{tpu_custom_call.1} parent=1 // pred_check
      _
    $region15: #{tpu_custom_call.1} parent=1 // pred_check_branch
      %37 = sbr.rel (0) target = $region17
    $region16: #{tpu_custom_call.1} parent=1 // pred_region
      %39 = vsyncadd [#allocation8], 0
      %s41 = sshll.u32 %s3, 4
      %s42 = int_to_ptr.hbm [resolvable:$true] %s41
      %s43 = sshll.u32 [#allocation9], 4
      %s44 = int_to_ptr.vmem [resolvable:$true] %s43
      %46 = dma.hbm_to_vmem [thread:$0]  %s42, 128, %s44, [#allocation8]
    $region17: #{tpu_custom_call.1} parent=1 // pred_fallthru
      _
    // Predicated region
    $region18: #{tpu_custom_call.1} parent=1 // pred_check
      _
    $region19: #{tpu_custom_call.1} parent=1 // pred_check_branch
      %48 = sbr.rel (0) target = $region21
    $region20: #{tpu_custom_call.1} parent=1 // pred_region
      %50 = dma.done [#allocation6], 128
    $region21: #{tpu_custom_call.1} parent=1 // pred_fallthru
      _
    // Predicated region
    $region22: #{tpu_custom_call.1} parent=1 // pred_check
      _
    $region23: #{tpu_custom_call.1} parent=1 // pred_check_branch
      %52 = sbr.rel (0) target = $region25
    $region24: #{tpu_custom_call.1} parent=1 // pred_region
      %54 = dma.done [#allocation8], 128
    $region25: #{tpu_custom_call.1} parent=1 // pred_fallthru
      _
    // Predicated region
    $region26: #{tpu_custom_call.1} parent=1 // pred_check
      _
    $region27: #{tpu_custom_call.1} parent=1 // pred_check_branch
      %56 = sbr.rel (0) target = $region29
    $region28: #{tpu_custom_call.1} parent=1 // pred_region
      %58 = dma.done [#allocation8], 128
    $region29: #{tpu_custom_call.1} parent=1 // pred_fallthru
      _
    %p59 = scmp.eq.s32.totalorder 0, 0
    // Predicated region
    $region30: #{tpu_custom_call.1} parent=1 // pred_check
      %p60 = pneg %p59
    $region31: #{tpu_custom_call.1} parent=1 // pred_check_branch
      %62 = sbr.rel (%p60) target = $region33
    $region32: #{tpu_custom_call.1} parent=1 // pred_region
      %vm63 = vcmask 7168
      %64 = vst.msk [vmem:[#allocation2] sm:$0xff] %vm63, -inf
      %65 = vst.msk [vmem:[#allocation3] sm:$0xff] %vm63, 0.0
    $region33: #{tpu_custom_call.1} parent=1 // pred_fallthru
      _
    %s66 = sld [smem:[#allocation4]]
    %v67 = vstv %s66
    %v68 = vrcp.pop %v67
    %v69 = vmul.f32 %v67, %v68
    %v70 = vsub.f32 1.0, %v69
    %v71 = vmul.f32 %v68, %v70
    %v72 = vadd.f32 %v68, %v71
    %vm73 = vweird.f32 %v67
    %vm74 = vweird.f32 %v68
    %vm75 = vmor %vm73, %vm74
    %v76 = vsel %vm75, %v68, %v72
    %v77 = vand.u32 2147483647, %v67
    %vm78 = vcmp.eq.f32.partialorder %v77, 8.507059e+37
    %v79 = vand.u32 %v67, 2147483648
    %v80 = vor.u32 1.1754944e-38, %v79
    %v81 = vsel %vm78, %v80, %v76
    %s82 = vtos %v81
    %v83 = vld [vmem:[#allocation5] sm:$0xff]
    %v84 = vstv %s82
    %v85 = vmul.f32 %v83, %v84
    %v86 = vld [vmem:[#allocation7] sm:$0xff]
    %87 = vmatpush.xpose.msra.mxu0 0.0
    %88 = vmatpush.xpose.msra.mxu0 0.0
    %89 = vmatpush.xpose.msra.mxu0 0.0
    %90 = vmatpush.xpose.msra.mxu0 0.0
    %91 = vmatpush.xpose.msra.mxu0 0.0
    %92 = vmatpush.xpose.msra.mxu0 0.0
    %93 = vmatpush.xpose.msra.mxu0 0.0
    %94 = vmatpush.xpose.msra.mxu0 0.0
    %95 = vmatpush.xpose.msra.mxu0 0.0
    %96 = vmatpush.xpose.msra.mxu0 0.0
    %97 = vmatpush.xpose.msra.mxu0 0.0
    %98 = vmatpush.xpose.msra.mxu0 0.0
    %99 = vmatpush.xpose.msra.mxu0 0.0
    %100 = vmatpush.xpose.msra.mxu0 0.0
    %101 = vmatpush.xpose.msra.mxu0 0.0
    %102 = vmatpush.xpose.msra.mxu0 %v86
    %103 = vmatmul.f32.gmra.mxu0 %v85
    %v104 = vpop.f32.mrf.mxu0
    %v105 = vadd.f32 0.0, %v104
    %106 = vdwg.mxu0
    %s107 = smul.u32 0, 8
    %v108 = vlaneseq
    %v109 = vshrl.u32 %v108, 7
    %v110 = vstv %s107
    %v111 = vadd.s32 %v110, %v109
    %s112 = smul.u32 0, 8
    %v113 = vlaneseq
    %v114 = vand.u32 %v113, 127
    %v115 = vstv %s112
    %v116 = vadd.s32 %v115, %v114
    %vm117 = vcmp.eq.s32.totalorder %v111, %v116
    %vm118 = vcmp.ge.s32.totalorder %v116, 8
    %vm119 = vmor %vm117, %vm118
    %v120 = vsel %vm119, -inf, %v105
    %v121 = vld [vmem:[#allocation2] sm:$0xff]
    %vm122 = vcmask 64512
    %v123 = vsel %vm122, %v120, -inf
    %124 = vmax.xlane.f32.xlu0 %v123
    %v125 = vpop.xlane.xlu0 %124
    %v126 = vmax.f32 %v121, %v125
    %v127 = vsub.f32 %v121, %v126
    %v128 = vmul.f32 %v127, 1.442695
    %v129 = vpow.pop %v128
    %131 = vset.pattern.permute.xlu0 0
    %132 = vperm.xlu0 %131, %v126
    %v133 = vpop.permute.xlu0 %132
    %v135 = vsub.f32 %v120, %v133
    %v136 = vmul.f32 %v135, 1.442695
    %v137 = vpow.pop %v136
    %v138 = vld [vmem:[#allocation3] sm:$0xff]
    %v139 = vmul.f32 %v129, %v138
    %v140 = vsel %vm122, %v137, 0.0
    %141 = vadd.xlane.f32.xlu0 %v140
    %v142 = vpop.xlane.xlu0 %141
    %v143 = vadd.f32 %v139, %v142
    %vm144 = vcmask 7168
    %145 = vst.msk [vmem:[#allocation3] sm:$0xff] %vm144, %v143
    %146 = vst.msk [vmem:[#allocation2] sm:$0xff] %vm144, %v126
    // Predicated region
    $region34: #{tpu_custom_call.1} parent=1 // pred_check
      %p147 = pneg %p59
    $region35: #{tpu_custom_call.1} parent=1 // pred_check_branch
      %149 = sbr.rel (%p147) target = $region37
    $region36: #{tpu_custom_call.1} parent=1 // pred_region
      %v150 = vld [vmem:[#allocation9] sm:$0xff]
      %v151 = vmul.f32 %v85, %v150
      %152 = vadd.xlane.f32.xlu0 %v151
      %v153 = vpop.xlane.xlu0 %152
      %v154 = vld [vmem:[#allocation2] sm:$0xff]
      %v155 = vld [vmem:[#allocation3] sm:$0xff]
      %v156 = vlog2.pop %v155
      %v157 = vmul.f32 %v156, 0.6931472
      %v158 = vadd.f32 %v154, %v157
      %vm159 = vcmp.lt.s32.totalorder %v111, 8
      %v160 = vsub.f32 %v158, %v153
      %v161 = vsel %vm159, %v160, 0.0
      %162 = vst.msk [vmem:[%s4] sm:$0xff] %vm144, %v161
    $region37: #{tpu_custom_call.1} parent=1 // pred_fallthru
      _
    // Predicated region
    $region38: #{tpu_custom_call.1} parent=1 // pred_check
      _
    $region39: #{tpu_custom_call.1} parent=1 // pred_check_branch
      %164 = sbr.rel (0) target = $region41
    $region40: #{tpu_custom_call.1} parent=1 // pred_region
      _
    $region41: #{tpu_custom_call.1} parent=1 // pred_fallthru
      _
    // Predicated region
    $region42: #{tpu_custom_call.1} parent=1 // pred_check
      _
    $region43: #{tpu_custom_call.1} parent=1 // pred_check_branch
      %166 = sbr.rel (0) target = $region45
    $region44: #{tpu_custom_call.1} parent=1 // pred_region
      _
    $region45: #{tpu_custom_call.1} parent=1 // pred_fallthru
      _
    %167 = vsyncpa [#allocation6], 1
    %168 = vsyncpa [#allocation8], 1

</llo_original>
